<compile_context>
chip_gen: v5e
topology: v5e:2x2
jax: 0.10.0
libtpu: 0.0.40
codegen_flags: <defaults>
</compile_context>

<pallas_src>
import functools

import jax
import jax.numpy as jnp
from jax import lax
from jax.experimental import pallas as pl
from jax.experimental.pallas import tpu as pltpu


def _round_up(x: int, m: int) -> int:
    return ((x + m - 1) // m) * m


def _classifier_head_kernel(x_ref, w_ref, b_ref, o_ref, acc_ref, *,
                            inv_hw, hw, hw_tile, needs_mask):
    # x_ref: (tile_n, C, hw_tile)   w_ref: (C, Kpad)   b_ref: (1, Kpad)
    # o_ref: (tile_n, Kpad)         acc_ref: (tile_n, C) f32 scratch
    r = pl.program_id(1)

    @pl.when(r == 0)
    def _init():
        acc_ref[...] = jnp.zeros_like(acc_ref)

    x = x_ref[...]
    if needs_mask:
        # Tail chunk of the cdiv grid over HW: zero lanes past the valid extent so
        # out-of-bounds padding never leaks into the pooled sum.
        lane = lax.broadcasted_iota(jnp.int32, x.shape, dimension=x.ndim - 1)
        x = jnp.where(lane < (hw - r * hw_tile), x, jnp.zeros_like(x))
    # Partial spatial sum of this chunk, accumulated in f32 (no full f32 copy of x).
    acc_ref[...] += jnp.sum(x, axis=-1, dtype=jnp.float32)

    @pl.when(r == pl.num_programs(1) - 1)
    def _finalize():
        pooled = acc_ref[...] * inv_hw                               # (tile_n, C) f32
        # TODO(synk): dropout skipped — drop_rate defaults to 0.0 (forward no-op).
        w = w_ref[...]
        # Feed the MXU in the weight's storage dtype (no (C, Kpad) upcast); only the
        # tiny (tile_n, C) pooled activation is cast when dtypes differ.
        lhs = pooled if w.dtype == jnp.float32 else pooled.astype(w.dtype)
        out = jnp.dot(lhs, w, preferred_element_type=jnp.float32)    # (tile_n, Kpad)
        out = out + b_ref[...].astype(jnp.float32)                   # broadcast (1, Kpad)
        o_ref[...] = out.astype(o_ref.dtype)


def _pick_batch_tile(n_pad8: int, cap: int) -> int:
    """Largest multiple-of-8 divisor of the padded batch that is <= cap, and <= half
    the batch when the batch is big enough so grid axis 0 has work for both v7x TCs."""
    limit = min(cap, n_pad8)
    if n_pad8 >= 16:
        limit = min(limit, n_pad8 // 2)
    best = 8
    t = 8
    while t <= limit:
        if n_pad8 % t == 0:
            best = t
        t += 8
    return best


def classifier_head(x_nchw, weight, bias):
    """x_nchw: (N, C, H, W); weight: (K, C) like nn.Linear; bias: (K,)."""
    n, c, h, w = x_nchw.shape
    k = weight.shape[0]
    hw = h * w
    itemsize = jnp.dtype(x_nchw.dtype).itemsize

    # Lane-dense classifier output: pad K up to a multiple of 128 (unmasked vst);
    # zero-padded columns are sliced off after the call only if padding was added.
    k_pad = max(128, _round_up(k, 128))
    w_t = jnp.zeros((c, k_pad), weight.dtype).at[:, :k].set(weight.T)   # (C, Kpad)
    b2 = jnp.zeros((1, k_pad), bias.dtype).at[0, :k].set(bias)          # (1, Kpad)

    # Generation-aware VMEM budget (64 MiB/TC on v7x vs 128 MiB on v5e/v6e).
    try:
        vmem_cap = int(pltpu.get_tpu_info().vmem_capacity_bytes)
    except Exception:  # defensive fallback, safe on every generation
        vmem_cap = 64 * 1024 * 1024
    vmem_limit = min((vmem_cap * 3) // 4, 96 * 1024 * 1024)

    # Byte budget for one x block: push the double-buffered x tile toward ~8 MiB while
    # leaving room for the single-buffered weight/bias, the output double-buffer, the
    # f32 accumulator and some headroom.
    w_bytes = c * k_pad * jnp.dtype(weight.dtype).itemsize
    b_bytes = k_pad * jnp.dtype(bias.dtype).itemsize
    out_bytes = 2 * 256 * k_pad * itemsize            # worst-case tile_n = 256
    acc_bytes = 256 * c * 4
    headroom = 2 * 1024 * 1024
    x_block_budget = (vmem_limit - w_bytes - b_bytes - out_bytes - acc_bytes - headroom) // 2
    x_block_budget = max(512 * 1024, min(8 * 1024 * 1024, x_block_budget))

    # Batch tile: as large as the budget allows (multiple of 8, <= 256 rows), with
    # >= 2 tiles whenever the padded batch permits (v7x megacore).
    n_pad8 = _round_up(n, 8)
    min_lanes = hw if hw < 128 else 128
    tile_cap = max(8, (x_block_budget // (c * min_lanes * itemsize)) // 8 * 8)
    tile_n = _pick_batch_tile(n_pad8, min(256, tile_cap))
    n_pad = _round_up(n, tile_n)

    # Spatial chunk: largest multiple of 128 within the block budget; full extent
    # (single chunk, no masking) when the budget already covers all of HW.
    row_bytes = tile_n * c * itemsize
    hw_tile = max(128, ((x_block_budget // row_bytes) // 128) * 128)
    if hw_tile >= hw:
        hw_tile = hw
    grid_r = pl.cdiv(hw, hw_tile)
    needs_mask = (hw % hw_tile) != 0

    x_flat = x_nchw.reshape(n, c, hw)                 # pure glue reshape (layout only)
    if n_pad != n:
        x_flat = jnp.pad(x_flat, ((0, n_pad - n), (0, 0), (0, 0)))

    grid = (n_pad // tile_n, grid_r)

    # Advisory cost hint so XLA can overlap surrounding ops with this mem-bound call.
    cost = pl.CostEstimate(
        flops=n_pad * c * hw + 2 * n_pad * c * k_pad,
        transcendentals=0,
        bytes_accessed=(n_pad * c * hw * itemsize + w_bytes + b_bytes
                        + n_pad * k_pad * itemsize),
    )

    kernel = functools.partial(_classifier_head_kernel, inv_hw=1.0 / hw,
                               hw=hw, hw_tile=hw_tile, needs_mask=needs_mask)

    out = pl.pallas_call(
        kernel,
        out_shape=jax.ShapeDtypeStruct((n_pad, k_pad), x_nchw.dtype),
        grid_spec=pltpu.PrefetchScalarGridSpec(
            num_scalar_prefetch=0,
            grid=grid,
            in_specs=[
                # x: tiled over batch and the spatial-reduction axis (pipelined).
                pl.BlockSpec((tile_n, c, hw_tile), lambda i, r: (i, 0, r)),
                # Weight / bias: grid-invariant -> constant index_map, single buffer.
                pl.BlockSpec((c, k_pad), lambda i, r: (0, 0),
                             pipeline_mode=pl.Buffered(1)),
                pl.BlockSpec((1, k_pad), lambda i, r: (0, 0),
                             pipeline_mode=pl.Buffered(1)),
            ],
            out_specs=pl.BlockSpec((tile_n, k_pad), lambda i, r: (i, 0)),
            scratch_shapes=[pltpu.VMEM((tile_n, c), jnp.float32)],
        ),
        compiler_params=pltpu.CompilerParams(
            # Batch axis independent -> shards across v7x's 2 TCs; reduction serial.
            dimension_semantics=("parallel", "arbitrary"),
            vmem_limit_bytes=vmem_limit,
        ),
        cost_estimate=cost,
    )(x_flat, w_t, b2)

    if n_pad != n or k_pad != k:
        out = out[:n, :k]
    return out


if __name__ == "__main__":
    key = jax.random.PRNGKey(0)
    k_x, k_w, k_b = jax.random.split(key, 3)

    # Small shapes consistent with the module: batch=2, in_chs=4, spatial=16x16, classes=8.
    N, C, H, W = 2, 4, 16, 16
    NUM_CLASSES = 8

    x = jax.random.normal(k_x, (N, C, H, W), dtype=jnp.float32)
    # Deterministic parameter init (nn.Linear-shaped: weight (K, C), bias (K,)).
    bound = 1.0 / (C ** 0.5)
    weight = jax.random.uniform(k_w, (NUM_CLASSES, C), jnp.float32, -bound, bound)
    bias = jax.random.uniform(k_b, (NUM_CLASSES,), jnp.float32, -bound, bound)

    out = classifier_head(x, weight, bias)
    out = jax.block_until_ready(out)

    # Reference check in plain JAX (same math): global avg-pool + linear.
    ref = jnp.mean(x, axis=(2, 3)) @ weight.T + bias
    assert out.shape == (N, NUM_CLASSES)
    assert jnp.allclose(out, ref, atol=1e-5, rtol=1e-5)

    print("KERNEL_OK")
</pallas_src>

<mosaic_0001>
module attributes {stable_mosaic.version = 11 : i64} {
  func.func @_classifier_head_kernel(%arg0: i32, %arg1: i32, %arg2: memref<8x4x256xf32, #tpu.memory_space<vmem>>, %arg3: memref<4x128xf32, #tpu.memory_space<vmem>>, %arg4: memref<1x128xf32, #tpu.memory_space<vmem>>, %arg5: memref<8x128xf32, #tpu.memory_space<vmem>>, %arg6: memref<8x4xf32, #tpu.memory_space<vmem>>) attributes {dimension_semantics = [#tpu.dimension_semantics<parallel>, #tpu.dimension_semantics<arbitrary>], iteration_bounds = array<i64: 1, 1>, scalar_prefetch = 0 : i64, scratch_operands = 1 : i64, tpu.core_type = #tpu.core_type<tc>, window_params = [{transform_indices = @transform_0, window_bounds = array<i64: 8, 4, 256>}, {pipeline_mode = #tpu.pipeline_mode<synchronous>, transform_indices = @transform_1, window_bounds = array<i64: 4, 128>}, {pipeline_mode = #tpu.pipeline_mode<synchronous>, transform_indices = @transform_2, window_bounds = array<i64: 1, 128>}, {transform_indices = @transform_3, window_bounds = array<i64: 8, 128>}]} {
    %c0_i32 = arith.constant 0 : i32
    %0 = arith.cmpi eq, %arg1, %c0_i32 : i32
    %1 = arith.extui %0 : i1 to i32
    %c0_i32_0 = arith.constant 0 : i32
    %2 = arith.cmpi ne, %1, %c0_i32_0 : i32
    scf.if %2 {
      %cst_9 = arith.constant 0.000000e+00 : f32
      %11 = vector.broadcast %cst_9 : f32 to vector<8x4xf32>
      %c0_10 = arith.constant 0 : index
      %c0_11 = arith.constant 0 : index
      %12 = vector.load %arg6[%c0_10, %c0_11] : memref<8x4xf32, #tpu.memory_space<vmem>>, vector<8x4xf32>
      tpu.vector_store %arg6[%c0_10, %c0_11], %11 {strides = array<i32>} : memref<8x4xf32, #tpu.memory_space<vmem>>, vector<8x4xf32>,
    } else {
    }
    %c0 = arith.constant 0 : index
    %c0_1 = arith.constant 0 : index
    %c0_2 = arith.constant 0 : index
    %3 = vector.load %arg2[%c0, %c0_1, %c0_2] : memref<8x4x256xf32, #tpu.memory_space<vmem>>, vector<8x4x256xf32>
    %c0_3 = arith.constant 0 : index
    %c0_4 = arith.constant 0 : index
    %4 = vector.load %arg6[%c0_3, %c0_4] : memref<8x4xf32, #tpu.memory_space<vmem>>, vector<8x4xf32>
    %cst = arith.constant dense<0.000000e+00> : vector<8x4xf32>
    %5 = vector.multi_reduction <add>, %3, %cst [2] : vector<8x4x256xf32> to vector<8x4xf32>
    %6 = arith.addf %4, %5 : vector<8x4xf32>
    %c0_5 = arith.constant 0 : index
    %c0_6 = arith.constant 0 : index
    %7 = vector.load %arg6[%c0_5, %c0_6] : memref<8x4xf32, #tpu.memory_space<vmem>>, vector<8x4xf32>
    tpu.vector_store %arg6[%c0_5, %c0_6], %6 {strides = array<i32>} : memref<8x4xf32, #tpu.memory_space<vmem>>, vector<8x4xf32>,
    %c0_i32_7 = arith.constant 0 : i32
    %8 = arith.cmpi eq, %arg1, %c0_i32_7 : i32
    %9 = arith.extui %8 : i1 to i32
    %c0_i32_8 = arith.constant 0 : i32
    %10 = arith.cmpi ne, %9, %c0_i32_8 : i32
    scf.if %10 {
      %c0_9 = arith.constant 0 : index
      %c0_10 = arith.constant 0 : index
      %11 = vector.load %arg6[%c0_9, %c0_10] : memref<8x4xf32, #tpu.memory_space<vmem>>, vector<8x4xf32>
      %cst_11 = arith.constant 3.906250e-03 : f32
      %12 = vector.broadcast %cst_11 : f32 to vector<8x4xf32>
      %13 = arith.mulf %11, %12 : vector<8x4xf32>
      %c0_12 = arith.constant 0 : index
      %c0_13 = arith.constant 0 : index
      %14 = vector.load %arg3[%c0_12, %c0_13] : memref<4x128xf32, #tpu.memory_space<vmem>>, vector<4x128xf32>
      %cst_14 = arith.constant dense<0.000000e+00> : vector<8x128xf32>
      %15 = tpu.matmul %13, %14, %cst_14 {dimension_numbers = #tpu.dot_dimension_numbers<[1], [0], [0], [1], [0, 0, 1, 1], [], []>} : vector<8x4xf32>, vector<4x128xf32>, vector<8x128xf32> -> vector<8x128xf32>
      %c0_15 = arith.constant 0 : index
      %c0_16 = arith.constant 0 : index
      %16 = vector.load %arg4[%c0_15, %c0_16] : memref<1x128xf32, #tpu.memory_space<vmem>>, vector<1x128xf32>
      %17 = vector.broadcast %16 : vector<1x128xf32> to vector<8x128xf32>
      %18 = arith.addf %15, %17 : vector<8x128xf32>
      %c0_17 = arith.constant 0 : index
      %c0_18 = arith.constant 0 : index
      %19 = vector.load %arg5[%c0_17, %c0_18] : memref<8x128xf32, #tpu.memory_space<vmem>>, vector<8x128xf32>
      tpu.vector_store %arg5[%c0_17, %c0_18], %18 {strides = array<i32>} : memref<8x128xf32, #tpu.memory_space<vmem>>, vector<8x128xf32>,
    } else {
    }
    return
  }
  func.func @transform_0(%arg0: i32, %arg1: i32) -> (i32, i32, i32) {
    %c0_i32 = arith.constant 0 : i32
    %c0_i32_0 = arith.constant 0 : i32
    return %arg0, %c0_i32, %arg1 : i32, i32, i32
  }
  func.func @transform_1(%arg0: i32, %arg1: i32) -> (i32, i32) {
    %c0_i32 = arith.constant 0 : i32
    %c0_i32_0 = arith.constant 0 : i32
    %c0_i32_1 = arith.constant 0 : i32
    return %c0_i32, %c0_i32_0 : i32, i32
  }
  func.func @transform_2(%arg0: i32, %arg1: i32) -> (i32, i32) {
    %c0_i32 = arith.constant 0 : i32
    %c0_i32_0 = arith.constant 0 : i32
    %c0_i32_1 = arith.constant 0 : i32
    return %c0_i32, %c0_i32_0 : i32, i32
  }
  func.func @transform_3(%arg0: i32, %arg1: i32) -> (i32, i32) {
    %c0_i32 = arith.constant 0 : i32
    %c0_i32_0 = arith.constant 0 : i32
    return %arg0, %c0_i32 : i32, i32
  }
}

</mosaic_0001>

<llo_original>
// kernel: tpu_custom_call.1
$region0: #{tpu_custom_call.1}
  #allocation0 [shape = 'u32[]', space=smem, size = 0x4, offset = 0x4, fixed_abs, tag = 'smem constant byte address 0x4 - core index']
  #allocation1 [shape = 'u32[72,128]{1,0:T(1,128)}', space=vmem, size = 0x9000, scoped, tag = 'internal scratch']
  #allocation2 [shape = 'f32[8,4]{1,0:T(8,128)}', space=vmem, size = 0x1000, scoped, tag = 'scratch operand']
  %s0 = inlined_call_operand.hbm [shape: f32[8,4,256], index: 0, kind: input, shape index: {}]
  %s1 = inlined_call_operand.hbm [shape: f32[4,128], index: 1, kind: input, shape index: {}]
  %s2 = inlined_call_operand.vmem [shape: f32[1,128], index: 2, kind: input, shape index: {}]
  %s3 = inlined_call_operand.hbm [shape: f32[8,128], index: 3, kind: output, shape index: {}]
  %s4 = sld [smem:[#allocation0]]
  $region38: #{tpu_custom_call.1} parent=0
    _
  %s6 = ssub.s32 1, %s4
  %s7 = scalar_select 0, %s6, %s4
  $region1: #{tpu_custom_call.1} parent=0
    #allocation3 [shape = 'u8[32768]{0}', space=vmem, size = 0x8000, scoped, tag = 'input window, operand 0, single buffered']
    #allocation4 [shape = 's32[1]{0}', space=sflag, size = 0x4, scoped, tag = 'scoped memory for tpu_custom_call.1']
    #allocation5 [shape = 's32[1]{0}', space=sflag, size = 0x4, scoped, tag = 'scoped memory for tpu_custom_call.1']
    #allocation6 [shape = 'u8[2048]{0}', space=vmem, size = 0x800, scoped, tag = 'input window, operand 1, single buffered']
    #allocation7 [shape = 's32[1]{0}', space=sflag, size = 0x4, scoped, tag = 'scoped memory for tpu_custom_call.1']
    #allocation8 [shape = 'u8[4096]{0}', space=vmem, size = 0x1000, scoped, tag = 'output window, operand 0, single buffered']
    %8 = vsyncpa [#allocation4], 0
    %9 = vsyncpa [#allocation7], 0
    %10 = vsyncpa [#allocation5], 0
    // Predicated region
    $region2: #{tpu_custom_call.1} parent=1 // pred_check
      _
    $region3: #{tpu_custom_call.1} parent=1 // pred_check_branch
      %12 = sbr.rel (0) target = $region5
    $region4: #{tpu_custom_call.1} parent=1 // pred_region
      %14 = vsyncadd [#allocation4], 0
      %s15 = sshll.u32 %s0, 4
      %s16 = int_to_ptr.hbm [resolvable:$true] %s15
      %s17 = sshll.u32 [#allocation3], 4
      %s18 = int_to_ptr.vmem [resolvable:$true] %s17
      %23 = dma.hbm_to_vmem [thread:$0]  %s16, 1024, %s18, [#allocation4], 128, 128, 8
    $region5: #{tpu_custom_call.1} parent=1 // pred_fallthru
      _
    // Predicated region
    $region6: #{tpu_custom_call.1} parent=1 // pred_check
      _
    $region7: #{tpu_custom_call.1} parent=1 // pred_check_branch
      %25 = sbr.rel (0) target = $region9
    $region8: #{tpu_custom_call.1} parent=1 // pred_region
      %27 = vsyncadd [#allocation7], 0
      %s29 = sshll.u32 %s1, 4
      %s30 = int_to_ptr.hbm [resolvable:$true] %s29
      %s31 = sshll.u32 [#allocation6], 4
      %s32 = int_to_ptr.vmem [resolvable:$true] %s31
      %34 = dma.hbm_to_vmem [thread:$0]  %s30, 64, %s32, [#allocation7]
    $region9: #{tpu_custom_call.1} parent=1 // pred_fallthru
      _
    // Predicated region
    $region10: #{tpu_custom_call.1} parent=1 // pred_check
      _
    $region11: #{tpu_custom_call.1} parent=1 // pred_check_branch
      %36 = sbr.rel (0) target = $region13
    $region12: #{tpu_custom_call.1} parent=1 // pred_region
      _
    $region13: #{tpu_custom_call.1} parent=1 // pred_fallthru
      _
    // Predicated region
    $region14: #{tpu_custom_call.1} parent=1 // pred_check
      _
    $region15: #{tpu_custom_call.1} parent=1 // pred_check_branch
      %38 = sbr.rel (0) target = $region17
    $region16: #{tpu_custom_call.1} parent=1 // pred_region
      %40 = dma.done [#allocation4], 1024
    $region17: #{tpu_custom_call.1} parent=1 // pred_fallthru
      _
    // Predicated region
    $region18: #{tpu_custom_call.1} parent=1 // pred_check
      _
    $region19: #{tpu_custom_call.1} parent=1 // pred_check_branch
      %42 = sbr.rel (0) target = $region21
    $region20: #{tpu_custom_call.1} parent=1 // pred_region
      %44 = dma.done [#allocation7], 64
    $region21: #{tpu_custom_call.1} parent=1 // pred_fallthru
      _
    %p45 = scmp.eq.s32.totalorder 0, 0
    // Predicated region
    $region22: #{tpu_custom_call.1} parent=1 // pred_check
      %p46 = pneg %p45
    $region23: #{tpu_custom_call.1} parent=1 // pred_check_branch
      %48 = sbr.rel (%p46) target = $region25
    $region24: #{tpu_custom_call.1} parent=1 // pred_region
      %vm49 = vcmask 31744
      %50 = vst.msk [vmem:[#allocation2] sm:$0xff] %vm49, 0.0
    $region25: #{tpu_custom_call.1} parent=1 // pred_fallthru
      _
    %v51 = vld [vmem:[#allocation3] sm:$0xff]
    %v52 = vld [vmem:[#allocation3 + $0x8] sm:$0xff]
    %v53 = vld [vmem:[#allocation3 + $0x10] sm:$0xff]
    %v54 = vld [vmem:[#allocation3 + $0x18] sm:$0xff]
    %v55 = vld [vmem:[#allocation3 + $0x20] sm:$0xff]
    %v56 = vld [vmem:[#allocation3 + $0x28] sm:$0xff]
    %v57 = vld [vmem:[#allocation3 + $0x30] sm:$0xff]
    %v58 = vld [vmem:[#allocation3 + $0x38] sm:$0xff]
    %v59 = vld [vmem:[#allocation2] sm:$0xff]
    %68 = vst [vmem:[#allocation1] ss:$2 sm:$0xff] %v51
    %v69 = vld.sshfl [vmem:[#allocation1] sm:$0xff pattern:$0x75316420]
    %v70 = vld.sshfl [vmem:[#allocation1 + $0x8] sm:$0xff pattern:$0x75316420]
    %s71 = scalar_lea.vmem [#allocation1], 16
    %72 = vst [vmem:[%s71] ss:$2 sm:$0xff] %v52
    %v73 = vld.sshfl [vmem:[#allocation1 + $0x10] sm:$0xff pattern:$0x75316420]
    %v74 = vld.sshfl [vmem:[#allocation1 + $0x18] sm:$0xff pattern:$0x75316420]
    %s75 = scalar_lea.vmem [#allocation1], 32
    %76 = vst [vmem:[%s75] ss:$2 sm:$0xff] %v53
    %v77 = vld.sshfl [vmem:[#allocation1 + $0x20] sm:$0xff pattern:$0x75316420]
    %v78 = vld.sshfl [vmem:[#allocation1 + $0x28] sm:$0xff pattern:$0x75316420]
    %s79 = scalar_lea.vmem [#allocation1], 48
    %80 = vst [vmem:[%s79] ss:$2 sm:$0xff] %v54
    %v81 = vld.sshfl [vmem:[#allocation1 + $0x30] sm:$0xff pattern:$0x75316420]
    %v82 = vld.sshfl [vmem:[#allocation1 + $0x38] sm:$0xff pattern:$0x75316420]
    %83 = vst [vmem:[#allocation1] ss:$2 sm:$0xff] %v55
    %v84 = vld.sshfl [vmem:[#allocation1] sm:$0xff pattern:$0x75316420]
    %v85 = vld.sshfl [vmem:[#allocation1 + $0x8] sm:$0xff pattern:$0x75316420]
    %86 = vst [vmem:[%s71] ss:$2 sm:$0xff] %v56
    %v87 = vld.sshfl [vmem:[#allocation1 + $0x10] sm:$0xff pattern:$0x75316420]
    %v88 = vld.sshfl [vmem:[#allocation1 + $0x18] sm:$0xff pattern:$0x75316420]
    %89 = vst [vmem:[%s75] ss:$2 sm:$0xff] %v57
    %v90 = vld.sshfl [vmem:[#allocation1 + $0x20] sm:$0xff pattern:$0x75316420]
    %v91 = vld.sshfl [vmem:[#allocation1 + $0x28] sm:$0xff pattern:$0x75316420]
    %92 = vst [vmem:[%s79] ss:$2 sm:$0xff] %v58
    %v93 = vld.sshfl [vmem:[#allocation1 + $0x30] sm:$0xff pattern:$0x75316420]
    %v94 = vld.sshfl [vmem:[#allocation1 + $0x38] sm:$0xff pattern:$0x75316420]
    %vm111 = vcmask 1043456
    %v112 = vsel %vm111, %v69, 0.0
    %v113 = vsel %vm111, %v70, 0.0
    %v114 = vadd.f32 %v112, %v113
    %115 = vadd.xlane.f32.xlu0 %v114
    %v116 = vpop.xlane.xlu0 %115
    %v117 = vsel %vm111, %v73, 0.0
    %v118 = vsel %vm111, %v74, 0.0
    %v119 = vadd.f32 %v117, %v118
    %120 = vadd.xlane.f32.xlu0 %v119
    %v121 = vpop.xlane.xlu0 %120
    %v122 = vsel %vm111, %v77, 0.0
    %v123 = vsel %vm111, %v78, 0.0
    %v124 = vadd.f32 %v122, %v123
    %125 = vadd.xlane.f32.xlu0 %v124
    %v126 = vpop.xlane.xlu0 %125
    %v127 = vsel %vm111, %v81, 0.0
    %v128 = vsel %vm111, %v82, 0.0
    %v129 = vadd.f32 %v127, %v128
    %130 = vadd.xlane.f32.xlu0 %v129
    %v131 = vpop.xlane.xlu0 %130
    %v132 = vsel %vm111, %v84, 0.0
    %v133 = vsel %vm111, %v85, 0.0
    %v134 = vadd.f32 %v132, %v133
    %135 = vadd.xlane.f32.xlu0 %v134
    %v136 = vpop.xlane.xlu0 %135
    %v137 = vsel %vm111, %v87, 0.0
    %v138 = vsel %vm111, %v88, 0.0
    %v139 = vadd.f32 %v137, %v138
    %140 = vadd.xlane.f32.xlu0 %v139
    %v141 = vpop.xlane.xlu0 %140
    %v142 = vsel %vm111, %v90, 0.0
    %v143 = vsel %vm111, %v91, 0.0
    %v144 = vadd.f32 %v142, %v143
    %145 = vadd.xlane.f32.xlu0 %v144
    %v146 = vpop.xlane.xlu0 %145
    %v147 = vsel %vm111, %v93, 0.0
    %v148 = vsel %vm111, %v94, 0.0
    %v149 = vadd.f32 %v147, %v148
    %150 = vadd.xlane.f32.xlu0 %v149
    %v151 = vpop.xlane.xlu0 %150
    %v160 = vlaneseq
    %v161 = vand.u32 %v160, 127
    %v162 = vperm.slane %v116, %v161
    %v163 = vperm.slane %v121, %v161
    %v164 = vperm.slane %v126, %v161
    %v165 = vperm.slane %v131, %v161
    %v166 = vperm.slane %v136, %v161
    %v167 = vperm.slane %v141, %v161
    %v168 = vperm.slane %v146, %v161
    %v169 = vperm.slane %v151, %v161
    %vm170 = vcmask 1041409
    %v171 = vsel %vm170, %v163, %v162
    %vm172 = vcmask 1042434
    %v173 = vsel %vm172, %v164, %v171
    %vm174 = vcmask 1043459
    %v175 = vsel %vm174, %v165, %v173
    %vm176 = vcmask 1044484
    %v177 = vsel %vm176, %v166, %v175
    %vm178 = vcmask 1045509
    %v179 = vsel %vm178, %v167, %v177
    %vm180 = vcmask 1046534
    %v181 = vsel %vm180, %v168, %v179
    %vm182 = vcmask 1047559
    %v183 = vsel %vm182, %v169, %v181
    %v185 = vadd.f32 %v59, %v183
    %vm186 = vcmask 31744
    %187 = vst.msk [vmem:[#allocation2] sm:$0xff] %vm186, %v185
    // Predicated region
    $region26: #{tpu_custom_call.1} parent=1 // pred_check
      %p188 = pneg %p45
    $region27: #{tpu_custom_call.1} parent=1 // pred_check_branch
      %190 = sbr.rel (%p188) target = $region29
    $region28: #{tpu_custom_call.1} parent=1 // pred_region
      %v191 = vld [vmem:[#allocation2] sm:$0xff]
      %v192 = vmul.f32 %v191, 0.00390625
      %v193 = vld [vmem:[#allocation6] sm:$0xf]
      %v194 = vld [vmem:[%s2] sm:$0x1]
      %v196 = vperm.slane %v194, 0
      %v199 = vsel %vm186, %v192, 0
      %v202 = vsel %vm111, %v193, 0
      %204 = vmatpush.msra.mxu0 0.0
      %205 = vmatpush.msra.mxu0 0.0
      %206 = vmatpush.msra.mxu0 0.0
      %207 = vmatpush.msra.mxu0 0.0
      %208 = vmatpush.msra.mxu0 0.0
      %209 = vmatpush.msra.mxu0 0.0
      %210 = vmatpush.msra.mxu0 0.0
      %211 = vmatpush.msra.mxu0 0.0
      %212 = vmatpush.msra.mxu0 0.0
      %213 = vmatpush.msra.mxu0 0.0
      %214 = vmatpush.msra.mxu0 0.0
      %215 = vmatpush.msra.mxu0 0.0
      %216 = vmatpush.msra.mxu0 0.0
      %217 = vmatpush.msra.mxu0 0.0
      %218 = vmatpush.msra.mxu0 0.0
      %219 = vmatpush.msra.mxu0 %v202
      %220 = vmatmul.f32.gmra.mxu0 %v199
      %v221 = vpop.f32.mrf.mxu0
      %v222 = vadd.f32 %v196, %v221
      %223 = vdwg.mxu0
      %224 = vst [vmem:[#allocation8] sm:$0xff] %v222
    $region29: #{tpu_custom_call.1} parent=1 // pred_fallthru
      _
    // Predicated region
    $region30: #{tpu_custom_call.1} parent=1 // pred_check
      _
    $region31: #{tpu_custom_call.1} parent=1 // pred_check_branch
      %226 = sbr.rel (0) target = $region33
    $region32: #{tpu_custom_call.1} parent=1 // pred_region
      %228 = vsyncadd [#allocation5], 0
      %s230 = sshll.u32 [#allocation8], 4
      %s231 = int_to_ptr.vmem [resolvable:$true] %s230
      %s232 = sshll.u32 %s3, 4
      %s233 = int_to_ptr.hbm [resolvable:$true] %s232
      %235 = dma.vmem_to_hbm [thread:$0]  %s231, 128, %s233, [#allocation5]
    $region33: #{tpu_custom_call.1} parent=1 // pred_fallthru
      _
    // Predicated region
    $region34: #{tpu_custom_call.1} parent=1 // pred_check
      _
    $region35: #{tpu_custom_call.1} parent=1 // pred_check_branch
      %237 = sbr.rel (0) target = $region37
    $region36: #{tpu_custom_call.1} parent=1 // pred_region
      %239 = dma.done [#allocation5], 128
    $region37: #{tpu_custom_call.1} parent=1 // pred_fallthru
      _
    %240 = vsyncpa [#allocation4], 1
    %241 = vsyncpa [#allocation7], 1
    %242 = vsyncpa [#allocation5], 1

</llo_original>
